<compile_context>
chip_gen: v7x
topology: tpu7x:2x2x1
jax: 0.10.0
libtpu: 0.0.40
codegen_flags: <defaults>
</compile_context>

<pallas_src>
import jax
import jax.numpy as jnp
from jax.experimental import pallas as pl
from jax.experimental.pallas import tpu as pltpu

IN_FEATURES = 11
OUT_FEATURES = 3
OUT_PAD = 8      # small lane pad for the f32 output head (== full array dim)
LANE = 128       # lane-dense padding for the hidden feature dim


def _round_up(n, m):
    return (n + m - 1) // m * m


def generator_kernel(x_ref, w1_ref, b1_ref, w2_ref, b2_ref, o_ref):
    # Cast activations to bf16 in-kernel (free VPU filler; no extra HBM pass).
    x = x_ref[...].astype(jnp.bfloat16)                                  # (tb, 11)
    # First matmul on the MXU, f32 accumulation (Mosaic pads the K=11 dim).
    h = jnp.dot(x, w1_ref[...], preferred_element_type=jnp.float32)      # (tb, Hp)
    # Bias + ReLU in f32 (VPU).  Padded hidden columns stay exactly zero.
    h = jnp.maximum(h + b1_ref[...], 0.0)
    # Second matmul: bf16 operands, f32 accumulation, narrow (8-lane) output.
    o = jnp.dot(h.astype(jnp.bfloat16), w2_ref[...],
                preferred_element_type=jnp.float32)                      # (tb, 8)
    o_ref[...] = o + b2_ref[...]


def generator_forward(x, w1, b1, w2, b2, *, tb=2048):
    """x: (B, 11) f32; w1: (11, H); b1: (H,); w2: (H, 3); b2: (3,) -> (B, 3) f32.

    Weights are stored as (in_features, out_features): the kernel computes
    x @ W + b (equivalent to PyTorch's x @ W.T with W of shape (out, in)).
    """
    B = x.shape[0]
    H = w1.shape[1]
    Hp = _round_up(H, LANE)

    # ---- batch tile sizing against a conservative VMEM budget ----------------
    # Per-row bytes in flight: f32 hidden + bf16 copy (6*Hp) plus lane-padded
    # x / output tiles (double-buffered) and the pre-store f32 result tile.
    per_row = 6 * Hp + 4096
    weight_bytes = 2 * (2 * 16 * Hp          # W1 bf16 (sublane-padded), dbl-buffered
                        + 8 * Hp * 4         # b1 f32
                        + Hp * LANE * 2      # W2 bf16 (lane-padded)
                        + 8 * LANE * 4)      # b2 f32
    vmem_budget = 28 * 1024 * 1024           # conservative: fits v7x's 64 MiB VMEM
    tb_cap = max(8, ((vmem_budget - weight_bytes) // per_row) // 8 * 8)
    tb_limit = max(8, (min(tb, tb_cap) // 8) * 8)

    B8 = _round_up(B, 8)
    n_steps = pl.cdiv(B8, tb_limit)
    if n_steps == 1 and B8 >= 1024:
        n_steps = 2                          # keep both v7x TensorCores busy
    tb_eff = _round_up(pl.cdiv(B8, n_steps), 8)
    if B >= 8:
        tb_eff = min(tb_eff, (B // 8) * 8)   # last block partial instead of oversized
    grid = (pl.cdiv(B, tb_eff),)

    # ---- wrapper-side zero padding of the (tiny, resident) weights -----------
    w1p = jnp.zeros((IN_FEATURES, Hp), jnp.bfloat16)
    w1p = w1p.at[:, :H].set(w1.astype(jnp.bfloat16))
    b1p = jnp.zeros((1, Hp), jnp.float32).at[:, :H].set(b1.reshape(1, -1))
    w2p = jnp.zeros((Hp, OUT_PAD), jnp.bfloat16)
    w2p = w2p.at[:H, :OUT_FEATURES].set(w2.astype(jnp.bfloat16))
    b2p = jnp.zeros((1, OUT_PAD), jnp.float32)
    b2p = b2p.at[:, :OUT_FEATURES].set(b2.reshape(1, -1))

    vmem_est = weight_bytes + per_row * tb_eff + (4 << 20)
    vmem_limit = int(min(max(vmem_est, 16 << 20), 40 << 20))

    out = pl.pallas_call(
        generator_kernel,
        out_shape=jax.ShapeDtypeStruct((B, OUT_PAD), jnp.float32),
        grid=grid,
        in_specs=[
            pl.BlockSpec((tb_eff, IN_FEATURES), lambda i: (i, 0)),  # x tile (f32)
            pl.BlockSpec((IN_FEATURES, Hp),     lambda i: (0, 0)),  # W1 (resident)
            pl.BlockSpec((1, Hp),               lambda i: (0, 0)),  # b1 (resident)
            pl.BlockSpec((Hp, OUT_PAD),         lambda i: (0, 0)),  # W2 (resident)
            pl.BlockSpec((1, OUT_PAD),          lambda i: (0, 0)),  # b2 (resident)
        ],
        out_specs=pl.BlockSpec((tb_eff, OUT_PAD), lambda i: (i, 0)),
        compiler_params=pltpu.CompilerParams(
            dimension_semantics=("parallel",),
            vmem_limit_bytes=vmem_limit),
    )(x.astype(jnp.float32), w1p, b1p, w2p, b2p)

    return out[:, :OUT_FEATURES]


def init_generator_params(key, hidden_size,
                          in_features=IN_FEATURES, out_features=OUT_FEATURES):
    """PyTorch nn.Linear-like init: U[-1/sqrt(fan_in), 1/sqrt(fan_in)]."""
    k1, k2, k3, k4 = jax.random.split(key, 4)
    bound1 = 1.0 / jnp.sqrt(in_features)
    bound2 = 1.0 / jnp.sqrt(hidden_size)
    # stored as (in, out) so the kernel does x @ W
    w1 = jax.random.uniform(k1, (in_features, hidden_size), jnp.float32,
                            -bound1, bound1)
    b1 = jax.random.uniform(k2, (hidden_size,), jnp.float32, -bound1, bound1)
    w2 = jax.random.uniform(k3, (hidden_size, out_features), jnp.float32,
                            -bound2, bound2)
    b2 = jax.random.uniform(k4, (out_features,), jnp.float32, -bound2, bound2)
    return w1, b1, w2, b2


def _reference(x, w1, b1, w2, b2):
    """Pure-JAX reference mirroring the kernel's bf16 MXU operands / f32 accum."""
    xb = x.astype(jnp.bfloat16).astype(jnp.float32)
    w1b = w1.astype(jnp.bfloat16).astype(jnp.float32)
    w2b = w2.astype(jnp.bfloat16).astype(jnp.float32)
    h = jnp.maximum(xb @ w1b + b1.reshape(1, -1), 0.0)
    return h.astype(jnp.bfloat16).astype(jnp.float32) @ w2b + b2.reshape(1, -1)


if __name__ == "__main__":
    key = jax.random.PRNGKey(0)
    kx, kp = jax.random.split(key)

    hidden_size = 32
    w1, b1, w2, b2 = init_generator_params(kp, hidden_size)

    # Primary check: small exact-fit batch.
    x = jax.random.normal(kx, (8, IN_FEATURES), jnp.float32)
    out = jax.block_until_ready(generator_forward(x, w1, b1, w2, b2))
    assert out.shape == (8, OUT_FEATURES)
    assert bool(jnp.allclose(out, _reference(x, w1, b1, w2, b2),
                             atol=1e-4, rtol=1e-4))

    # Batch not a multiple of the sublane granule: exercises the partial
    # (masked) last block and a 2-step grid.
    x13 = jax.random.normal(kx, (13, IN_FEATURES), jnp.float32)
    out13 = jax.block_until_ready(generator_forward(x13, w1, b1, w2, b2))
    assert out13.shape == (13, OUT_FEATURES)
    assert bool(jnp.allclose(out13, _reference(x13, w1, b1, w2, b2),
                             atol=1e-4, rtol=1e-4))

    # Explicit multi-step pipelined grid with evenly dividing tiles.
    x16 = jax.random.normal(kx, (16, IN_FEATURES), jnp.float32)
    out16 = jax.block_until_ready(generator_forward(x16, w1, b1, w2, b2, tb=8))
    assert out16.shape == (16, OUT_FEATURES)
    assert bool(jnp.allclose(out16, _reference(x16, w1, b1, w2, b2),
                             atol=1e-4, rtol=1e-4))

    print("KERNEL_OK")
</pallas_src>

<mosaic_0001>
module attributes {stable_mosaic.version = 11 : i64} {
  func.func @generator_kernel(%arg0: i32, %arg1: memref<8x11xf32, #tpu.memory_space<vmem>>, %arg2: memref<11x128xbf16, #tpu.memory_space<vmem>>, %arg3: memref<1x128xf32, #tpu.memory_space<vmem>>, %arg4: memref<128x8xbf16, #tpu.memory_space<vmem>>, %arg5: memref<1x8xf32, #tpu.memory_space<vmem>>, %arg6: memref<8x8xf32, #tpu.memory_space<vmem>>) attributes {dimension_semantics = [#tpu.dimension_semantics<parallel>], iteration_bounds = array<i64: 1>, scalar_prefetch = 0 : i64, scratch_operands = 0 : i64, tpu.core_type = #tpu.core_type<tc>, window_params = [{transform_indices = @transform_0, window_bounds = array<i64: 8, 11>}, {pipeline_mode = #tpu.pipeline_mode<synchronous>, transform_indices = @transform_1, window_bounds = array<i64: 11, 128>}, {pipeline_mode = #tpu.pipeline_mode<synchronous>, transform_indices = @transform_2, window_bounds = array<i64: 1, 128>}, {pipeline_mode = #tpu.pipeline_mode<synchronous>, transform_indices = @transform_3, window_bounds = array<i64: 128, 8>}, {pipeline_mode = #tpu.pipeline_mode<synchronous>, transform_indices = @transform_4, window_bounds = array<i64: 1, 8>}, {transform_indices = @transform_5, window_bounds = array<i64: 8, 8>}]} {
    %c0 = arith.constant 0 : index
    %c0_0 = arith.constant 0 : index
    %0 = vector.load %arg1[%c0, %c0_0] : memref<8x11xf32, #tpu.memory_space<vmem>>, vector<8x11xf32>
    %1 = arith.truncf %0 : vector<8x11xf32> to vector<8x11xbf16>
    %c0_1 = arith.constant 0 : index
    %c0_2 = arith.constant 0 : index
    %2 = vector.load %arg2[%c0_1, %c0_2] : memref<11x128xbf16, #tpu.memory_space<vmem>>, vector<11x128xbf16>
    %cst = arith.constant dense<0.000000e+00> : vector<8x128xf32>
    %3 = tpu.matmul %1, %2, %cst {dimension_numbers = #tpu.dot_dimension_numbers<[1], [0], [0], [1], [0, 0, 1, 1], [], []>} : vector<8x11xbf16>, vector<11x128xbf16>, vector<8x128xf32> -> vector<8x128xf32>
    %c0_3 = arith.constant 0 : index
    %c0_4 = arith.constant 0 : index
    %4 = vector.load %arg3[%c0_3, %c0_4] : memref<1x128xf32, #tpu.memory_space<vmem>>, vector<1x128xf32>
    %5 = vector.broadcast %4 : vector<1x128xf32> to vector<8x128xf32>
    %6 = arith.addf %3, %5 : vector<8x128xf32>
    %cst_5 = arith.constant 0.000000e+00 : f32
    %7 = vector.broadcast %cst_5 : f32 to vector<8x128xf32>
    %8 = arith.maximumf %6, %7 : vector<8x128xf32>
    %9 = arith.truncf %8 : vector<8x128xf32> to vector<8x128xbf16>
    %c0_6 = arith.constant 0 : index
    %c0_7 = arith.constant 0 : index
    %10 = vector.load %arg4[%c0_6, %c0_7] : memref<128x8xbf16, #tpu.memory_space<vmem>>, vector<128x8xbf16>
    %cst_8 = arith.constant dense<0.000000e+00> : vector<8x8xf32>
    %11 = tpu.matmul %9, %10, %cst_8 {dimension_numbers = #tpu.dot_dimension_numbers<[1], [0], [0], [1], [0, 0, 1, 1], [], []>} : vector<8x128xbf16>, vector<128x8xbf16>, vector<8x8xf32> -> vector<8x8xf32>
    %c0_9 = arith.constant 0 : index
    %c0_10 = arith.constant 0 : index
    %12 = vector.load %arg5[%c0_9, %c0_10] : memref<1x8xf32, #tpu.memory_space<vmem>>, vector<1x8xf32>
    %13 = vector.broadcast %12 : vector<1x8xf32> to vector<8x8xf32>
    %14 = arith.addf %11, %13 : vector<8x8xf32>
    %c0_11 = arith.constant 0 : index
    %c0_12 = arith.constant 0 : index
    %15 = vector.load %arg6[%c0_11, %c0_12] : memref<8x8xf32, #tpu.memory_space<vmem>>, vector<8x8xf32>
    tpu.vector_store %arg6[%c0_11, %c0_12], %14 {strides = array<i32>} : memref<8x8xf32, #tpu.memory_space<vmem>>, vector<8x8xf32>,
    return
  }
  func.func @transform_0(%arg0: i32) -> (i32, i32) {
    %c0_i32 = arith.constant 0 : i32
    %c0_i32_0 = arith.constant 0 : i32
    return %arg0, %c0_i32 : i32, i32
  }
  func.func @transform_1(%arg0: i32) -> (i32, i32) {
    %c0_i32 = arith.constant 0 : i32
    %c0_i32_0 = arith.constant 0 : i32
    %c0_i32_1 = arith.constant 0 : i32
    return %c0_i32, %c0_i32_0 : i32, i32
  }
  func.func @transform_2(%arg0: i32) -> (i32, i32) {
    %c0_i32 = arith.constant 0 : i32
    %c0_i32_0 = arith.constant 0 : i32
    %c0_i32_1 = arith.constant 0 : i32
    return %c0_i32, %c0_i32_0 : i32, i32
  }
  func.func @transform_3(%arg0: i32) -> (i32, i32) {
    %c0_i32 = arith.constant 0 : i32
    %c0_i32_0 = arith.constant 0 : i32
    %c0_i32_1 = arith.constant 0 : i32
    return %c0_i32, %c0_i32_0 : i32, i32
  }
  func.func @transform_4(%arg0: i32) -> (i32, i32) {
    %c0_i32 = arith.constant 0 : i32
    %c0_i32_0 = arith.constant 0 : i32
    %c0_i32_1 = arith.constant 0 : i32
    return %c0_i32, %c0_i32_0 : i32, i32
  }
  func.func @transform_5(%arg0: i32) -> (i32, i32) {
    %c0_i32 = arith.constant 0 : i32
    %c0_i32_0 = arith.constant 0 : i32
    return %arg0, %c0_i32 : i32, i32
  }
}

</mosaic_0001>

<llo_original>
// kernel: tpu_custom_call.1
$region0: #{tpu_custom_call.1}
  #allocation0 [shape = 'u32[]', space=smem, size = 0x4, offset = 0x4, fixed_abs, tag = 'smem constant byte address 0x4 - core index']
  #allocation1 [shape = 'u32[144,128]{1,0:T(1,128)}', space=vmem, size = 0x12000, scoped, tag = 'internal scratch']
  %s0 = inlined_call_operand.vmem [shape: f32[8,11], index: 0, kind: input, shape index: {}]
  %s1 = inlined_call_operand.vmem [shape: bf16[11,128], index: 1, kind: input, shape index: {}]
  %s2 = inlined_call_operand.vmem [shape: f32[1,128], index: 2, kind: input, shape index: {}]
  %s3 = inlined_call_operand.vmem [shape: bf16[128,8], index: 3, kind: input, shape index: {}]
  %s4 = inlined_call_operand.vmem [shape: f32[1,8], index: 4, kind: input, shape index: {}]
  %s5 = inlined_call_operand.hbm [shape: f32[8,8], index: 5, kind: output, shape index: {}]
  %s6 = sld [smem:[#allocation0]]
  $region30: #{tpu_custom_call.1} parent=0
    _
  %s8 = ssub.s32 1, %s6
  %s9 = scalar_select 0, %s8, %s6
  $region1: #{tpu_custom_call.1} parent=0
    #allocation2 [shape = 'u8[4096]{0}', space=vmem, size = 0x1000, scoped, tag = 'output window, operand 0, single buffered']
    #allocation3 [shape = 's32[1]{0}', space=sflag, size = 0x4, scoped, tag = 'scoped memory for tpu_custom_call.1']
    %10 = vsyncpa [#allocation3], 0
    // Predicated region
    $region2: #{tpu_custom_call.1} parent=1 // pred_check
      _
    $region3: #{tpu_custom_call.1} parent=1 // pred_check_branch
      %12 = sbr.rel (0) target = $region5
    $region4: #{tpu_custom_call.1} parent=1 // pred_region
      _
    $region5: #{tpu_custom_call.1} parent=1 // pred_fallthru
      _
    // Predicated region
    $region6: #{tpu_custom_call.1} parent=1 // pred_check
      _
    $region7: #{tpu_custom_call.1} parent=1 // pred_check_branch
      %14 = sbr.rel (0) target = $region9
    $region8: #{tpu_custom_call.1} parent=1 // pred_region
      _
    $region9: #{tpu_custom_call.1} parent=1 // pred_fallthru
      _
    // Predicated region
    $region10: #{tpu_custom_call.1} parent=1 // pred_check
      _
    $region11: #{tpu_custom_call.1} parent=1 // pred_check_branch
      %16 = sbr.rel (0) target = $region13
    $region12: #{tpu_custom_call.1} parent=1 // pred_region
      _
    $region13: #{tpu_custom_call.1} parent=1 // pred_fallthru
      _
    // Predicated region
    $region14: #{tpu_custom_call.1} parent=1 // pred_check
      _
    $region15: #{tpu_custom_call.1} parent=1 // pred_check_branch
      %18 = sbr.rel (0) target = $region17
    $region16: #{tpu_custom_call.1} parent=1 // pred_region
      _
    $region17: #{tpu_custom_call.1} parent=1 // pred_fallthru
      _
    // Predicated region
    $region18: #{tpu_custom_call.1} parent=1 // pred_check
      _
    $region19: #{tpu_custom_call.1} parent=1 // pred_check_branch
      %20 = sbr.rel (0) target = $region21
    $region20: #{tpu_custom_call.1} parent=1 // pred_region
      _
    $region21: #{tpu_custom_call.1} parent=1 // pred_fallthru
      _
    %v22 = vld [vmem:[%s0] sm:$0xff]
    %v23 = vpack.c.bf16 %v22, %v22
    %v24 = vld [vmem:[%s1] sm:$0xf]
    %v25 = vld [vmem:[%s1 + $0x4] sm:$0x3]
    %v26 = vld [vmem:[%s2] sm:$0x1]
    %v28 = vlaneseq
    %v29 = vshrl.u32 %v28, 7
    %v30 = vsub.s32 0, %v29
    %v31 = vrot.slane %v26, %v30
    %v35 = vunpack.c.l.b16 %v24
    %v36 = vunpack.c.l.b16 %v25
    %v37 = vpack.c.b16 %v36, %v35
    %vm38 = vcmask 89088
    %v40 = vsel %vm38, %v23, 0
    %vm42 = vcmask 1044480
    %vm43 = vcmask 1045504
    %v44 = vsel %vm42, 4294967295, 65535
    %v45 = vsel %vm43, %v44, 0
    %v47 = vand.u32 %v37, %v45
    %49 = vmatprep.subr.bf16.mxu0 0
    %50 = vmatpush1.bf16.msra.mxu0 %v47
    %51 = vmatprep.subr.bf16.mxu0 0
    %52 = vmatpush1.bf16.msra.mxu0 0
    %53 = vmatprep.subr.bf16.mxu0 0
    %54 = vmatpush1.bf16.msra.mxu0 0
    %55 = vmatprep.subr.bf16.mxu0 0
    %56 = vmatpush1.bf16.msra.mxu0 0
    %57 = vmatprep.subr.bf16.mxu0 0
    %58 = vmatpush1.bf16.msra.mxu0 0
    %59 = vmatprep.subr.bf16.mxu0 0
    %60 = vmatpush1.bf16.msra.mxu0 0
    %61 = vmatprep.subr.bf16.mxu0 0
    %62 = vmatpush1.bf16.msra.mxu0 0
    %63 = vmatprep.subr.bf16.mxu0 0
    %64 = vmatpush1.bf16.msra.mxu0 0
    %65 = vmatprep.subr.bf16.mxu0 0
    %66 = vmatpush1.bf16.msra.mxu0 0
    %67 = vmatprep.subr.bf16.mxu0 0
    %68 = vmatpush1.bf16.msra.mxu0 0
    %69 = vmatprep.subr.bf16.mxu0 0
    %70 = vmatpush1.bf16.msra.mxu0 0
    %71 = vmatprep.subr.bf16.mxu0 0
    %72 = vmatpush1.bf16.msra.mxu0 0
    %73 = vmatprep.subr.bf16.mxu0 0
    %74 = vmatpush1.bf16.msra.mxu0 0
    %75 = vmatprep.subr.bf16.mxu0 0
    %76 = vmatpush1.bf16.msra.mxu0 0
    %77 = vmatprep.subr.bf16.mxu0 0
    %78 = vmatpush1.bf16.msra.mxu0 0
    %79 = vmatprep.subr.bf16.mxu0 0
    %80 = vmatpush1.bf16.msra.mxu0 0
    %81 = vmatprep.mubr.bf16.mxu0 0
    %82 = vmatmul.mubr.bf16.gmra.mrb[0].mxu0 %v40
    %v83 = vpop.f32.mrb[0].mxu0
    %v84 = vadd.f32 %v31, %v83
    %v85 = vpop.f32.mrb[0].mxu0
    %v86 = vpop.f32.mrb[0].mxu0
    %v87 = vpop.f32.mrb[0].mxu0
    %88 = vdwg.mxu0
    %v89 = vmax.f32 %v84, 0.0
    %v90 = vpack.c.bf16 %v89, %v89
    %v91 = vld [vmem:[%s3] sm:$0xf]
    %v92 = vld [vmem:[%s3 + $0x4] sm:$0xf]
    %v93 = vld [vmem:[%s3 + $0x8] sm:$0xf]
    %v94 = vld [vmem:[%s3 + $0xc] sm:$0xf]
    %v95 = vld [vmem:[%s3 + $0x10] sm:$0xf]
    %v96 = vld [vmem:[%s3 + $0x14] sm:$0xf]
    %v97 = vld [vmem:[%s3 + $0x18] sm:$0xf]
    %v98 = vld [vmem:[%s3 + $0x1c] sm:$0xf]
    %v99 = vld [vmem:[%s3 + $0x20] sm:$0xf]
    %v100 = vld [vmem:[%s3 + $0x24] sm:$0xf]
    %v101 = vld [vmem:[%s3 + $0x28] sm:$0xf]
    %v102 = vld [vmem:[%s3 + $0x2c] sm:$0xf]
    %v103 = vld [vmem:[%s3 + $0x30] sm:$0xf]
    %v104 = vld [vmem:[%s3 + $0x34] sm:$0xf]
    %v105 = vld [vmem:[%s3 + $0x38] sm:$0xf]
    %v106 = vld [vmem:[%s3 + $0x3c] sm:$0xf]
    %v107 = vld [vmem:[%s4] sm:$0x1]
    %v109 = vlaneseq
    %v110 = vshrl.u32 %v109, 7
    %v111 = vsub.s32 0, %v110
    %v112 = vrot.slane %v107, %v111
    %v130 = vunpack.c.l.b16 %v91
    %v131 = vunpack.c.l.b16 %v92
    %v132 = vunpack.c.l.b16 %v93
    %v133 = vunpack.c.l.b16 %v94
    %v134 = vunpack.c.l.b16 %v95
    %v135 = vunpack.c.l.b16 %v96
    %v136 = vunpack.c.l.b16 %v97
    %v137 = vunpack.c.l.b16 %v98
    %v138 = vunpack.c.l.b16 %v99
    %v139 = vunpack.c.l.b16 %v100
    %v140 = vunpack.c.l.b16 %v101
    %v141 = vunpack.c.l.b16 %v102
    %v142 = vunpack.c.l.b16 %v103
    %v143 = vunpack.c.l.b16 %v104
    %v144 = vunpack.c.l.b16 %v105
    %v145 = vunpack.c.l.b16 %v106
    %v146 = vpack.c.b16 %v131, %v130
    %v147 = vpack.c.b16 %v133, %v132
    %v148 = vpack.c.b16 %v135, %v134
    %v149 = vpack.c.b16 %v137, %v136
    %v150 = vpack.c.b16 %v139, %v138
    %v151 = vpack.c.b16 %v141, %v140
    %v152 = vpack.c.b16 %v143, %v142
    %v153 = vpack.c.b16 %v145, %v144
    %162 = vmatprep.subr.bf16.mxu0 0
    %163 = vmatpush1.bf16.msra.mxu0 %v146
    %164 = vmatprep.subr.bf16.mxu0 0
    %165 = vmatpush1.bf16.msra.mxu0 %v147
    %166 = vmatprep.subr.bf16.mxu0 0
    %167 = vmatpush1.bf16.msra.mxu0 %v148
    %168 = vmatprep.subr.bf16.mxu0 0
    %169 = vmatpush1.bf16.msra.mxu0 %v149
    %170 = vmatprep.subr.bf16.mxu0 0
    %171 = vmatpush1.bf16.msra.mxu0 %v150
    %172 = vmatprep.subr.bf16.mxu0 0
    %173 = vmatpush1.bf16.msra.mxu0 %v151
    %174 = vmatprep.subr.bf16.mxu0 0
    %175 = vmatpush1.bf16.msra.mxu0 %v152
    %176 = vmatprep.subr.bf16.mxu0 0
    %177 = vmatpush1.bf16.msra.mxu0 %v153
    %178 = vmatprep.subr.bf16.mxu0 0
    %179 = vmatpush1.bf16.msra.mxu0 0
    %180 = vmatprep.subr.bf16.mxu0 0
    %181 = vmatpush1.bf16.msra.mxu0 0
    %182 = vmatprep.subr.bf16.mxu0 0
    %183 = vmatpush1.bf16.msra.mxu0 0
    %184 = vmatprep.subr.bf16.mxu0 0
    %185 = vmatpush1.bf16.msra.mxu0 0
    %186 = vmatprep.subr.bf16.mxu0 0
    %187 = vmatpush1.bf16.msra.mxu0 0
    %188 = vmatprep.subr.bf16.mxu0 0
    %189 = vmatpush1.bf16.msra.mxu0 0
    %190 = vmatprep.subr.bf16.mxu0 0
    %191 = vmatpush1.bf16.msra.mxu0 0
    %192 = vmatprep.subr.bf16.mxu0 0
    %193 = vmatpush1.bf16.msra.mxu0 0
    %194 = vmatprep.mubr.bf16.mxu0 0
    %195 = vmatmul.mubr.bf16.gmra.mrb[0].mxu0 %v90
    %v196 = vpop.f32.mrb[0].mxu0
    %v197 = vadd.f32 %v112, %v196
    %v198 = vpop.f32.mrb[0].mxu0
    %v199 = vpop.f32.mrb[0].mxu0
    %v200 = vpop.f32.mrb[0].mxu0
    %201 = vdwg.mxu0
    %vm202 = vcmask 64512
    %203 = vst.msk [vmem:[#allocation2] sm:$0xff] %vm202, %v197
    // Predicated region
    $region22: #{tpu_custom_call.1} parent=1 // pred_check
      _
    $region23: #{tpu_custom_call.1} parent=1 // pred_check_branch
      %205 = sbr.rel (0) target = $region25
    $region24: #{tpu_custom_call.1} parent=1 // pred_region
      %s207 = ssub.s32 128, 128
      %208 = vsyncadd [#allocation3], %s207
      %s210 = sshll.u32 [#allocation2], 4
      %s211 = int_to_ptr.vmem [resolvable:$true] %s210
      %213 = dma.vmem_to_hbm [thread:$0]  %s211, 128, %s5, [#allocation3]
    $region25: #{tpu_custom_call.1} parent=1 // pred_fallthru
      _
    // Predicated region
    $region26: #{tpu_custom_call.1} parent=1 // pred_check
      _
    $region27: #{tpu_custom_call.1} parent=1 // pred_check_branch
      %215 = sbr.rel (0) target = $region29
    $region28: #{tpu_custom_call.1} parent=1 // pred_region
      %216 = dma.done [#allocation3], 128
    $region29: #{tpu_custom_call.1} parent=1 // pred_fallthru
      _
    %217 = vsyncpa [#allocation3], 1

</llo_original>
